<compile_context>
chip_gen: v7x
topology: tpu7x:2x2x1
jax: 0.10.0
libtpu: 0.0.40
codegen_flags: <defaults>
</compile_context>

<pallas_src>
import functools
import math

import jax
import jax.numpy as jnp
from jax import lax
from jax.experimental import pallas as pl
from jax.experimental.pallas import tpu as pltpu

BN_EPS = 1e-5
_PAD = 128   # per-row halo on the flattened spatial axis (lane-tile aligned)


def _conv_bn_relu_kernel(x_ref, w_ref, gamma_ref, beta_ref, o_ref,
                         xpad_ref, b_ref, *, N, W, K, G):
    """Conv(3x3, pad=1) -> BN(batch stats) -> ReLU, all channels in one block.

    x_ref:     (N*Cin, H*W)              flattened NCHW input (rows: n-major, c-minor)
    w_ref:     (Cout, KK_pad*Cin)        im2col weight matrix (zero-padded taps)
    gamma_ref: (Cout, 1)                 BN weight
    beta_ref:  (Cout, 1)                 BN bias
    o_ref:     (N, Cout, H*W)            output
    xpad_ref:  (N*Cin, H*W + 2*_PAD)     VMEM scratch: per-row halo-padded input
    b_ref:     (KK_pad*Cin, N*H*W)       VMEM scratch: im2col matrix
    """
    NC, HW = x_ref.shape
    Cin = NC // N
    KK = K * K
    KK_pad = b_ref.shape[0] // Cin
    Cout = o_ref.shape[1]

    # ---- halo-only zeroing (interior is fully overwritten next) ----
    xpad_ref[:, :_PAD] = jnp.zeros((NC, _PAD), xpad_ref.dtype)
    xpad_ref[:, _PAD + HW:] = jnp.zeros((NC, _PAD), xpad_ref.dtype)
    xpad_ref[:, _PAD:_PAD + HW] = x_ref[...]

    # Column masks: a flat shift of +-1 wraps across image rows; those taps are
    # exactly the conv zero-padding terms on the W axis and must be zeroed.
    col = lax.broadcasted_iota(jnp.int32, (NC, HW), 1)
    w_idx = col % W
    left_ok = w_idx != 0          # taps with kw == 0 read column w-1
    right_ok = w_idx != (W - 1)   # taps with kw == K-1 read column w+1

    zeros_piece = jnp.zeros((NC, HW), jnp.float32)

    def tap_piece(t):
        """Shifted, boundary-masked window for tap t: one full-sublane read."""
        if t >= KK:                       # virtual padding tap (rows 36:40 of B)
            return zeros_piece
        kh, kw = divmod(t, K)
        s = (kh - K // 2) * W + (kw - K // 2)     # flat shift of this tap
        off = _PAD + s
        piece = xpad_ref[:, off:off + HW]         # (N*Cin, HW) single read
        if kw == 0:
            piece = jnp.where(left_ok, piece, 0.0)
        elif kw == K - 1:
            piece = jnp.where(right_ok, piece, 0.0)
        return piece

    # ---- build im2col B with full (8,128)-tile stores: G taps per row-group ----
    for u in range(KK_pad // G):
        pieces = [tap_piece(u * G + g) for g in range(G)]
        for n in range(N):
            rows = [p[n * Cin:(n + 1) * Cin, :] for p in pieces]
            block = rows[0] if G == 1 else jnp.concatenate(rows, axis=0)
            b_ref[u * G * Cin:(u + 1) * G * Cin, n * HW:(n + 1) * HW] = block

    # ---- conv as ONE MXU contraction: (Cout, KKC_pad) @ (KKC_pad, N*HW) ----
    acc = jnp.dot(w_ref[...], b_ref[...], preferred_element_type=jnp.float32)

    # ---- BatchNorm (training-mode batch stats), mean-centered two-pass ----
    inv_cnt = 1.0 / (N * HW)
    mean = jnp.sum(acc, axis=1, keepdims=True) * inv_cnt            # (Cout, 1)
    centered = acc - mean
    var = jnp.sum(centered * centered, axis=1, keepdims=True) * inv_cnt
    scale = gamma_ref[...] * lax.rsqrt(var + BN_EPS)                # (Cout, 1)
    y = jnp.maximum(centered * scale + beta_ref[...], 0.0)          # ReLU

    # ---- lane-dense output stores: (Cout, HW) per sample, 128-lane aligned ----
    for n in range(N):
        o_ref[n] = y[:, n * HW:(n + 1) * HW].astype(o_ref.dtype)


def conv_bn_relu(x_nchw, w_oihw, bias, gamma, beta):
    """NCHW in, NCHW out -- matches PyTorch ConvBnRelu.forward (training mode).

    NOTE: at toy sizes the call is overhead-bound; batch more images (or fuse
    several ConvBnRelu layers) into one call for real-world throughput.
    """
    N, Cin, H, W = x_nchw.shape
    Cout, Cin_w, KH, KW = w_oihw.shape
    assert Cin_w == Cin and KH == KW == 3, "module uses kernel_size=3, padding=1"
    K = KH
    HW = H * W
    KK = K * K

    # Tap-group size so that G*Cin is a multiple of 8 -> unmasked B stores.
    G = 8 // math.gcd(8, Cin)
    KK_pad = -(-KK // G) * G                 # ceil(KK / G) * G
    KKC_pad = KK_pad * Cin

    # Free reshape only (NCHW stays contiguous in HBM): rows = (n, c).
    x_flat = x_nchw.reshape(N * Cin, HW).astype(jnp.float32)

    # Parameter repack (tiny, host/XLA side): (Cout,Cin,KH,KW) -> (Cout, KK*Cin)
    # with column order (kh*KW + kw)*Cin + c, zero-padded to KKC_pad columns so
    # the padded B rows contribute nothing.
    w_mat = jnp.transpose(w_oihw.astype(jnp.float32), (0, 2, 3, 1)).reshape(Cout, KK * Cin)
    w_mat = jnp.pad(w_mat, ((0, 0), (0, KKC_pad - KK * Cin)))

    # Conv bias cancels exactly under batch-statistics BN -> not passed in.
    del bias

    gamma2 = gamma.reshape(Cout, 1).astype(jnp.float32)
    beta2 = beta.reshape(Cout, 1).astype(jnp.float32)

    kernel = functools.partial(_conv_bn_relu_kernel, N=N, W=W, K=K, G=G)

    flops = 2 * Cout * KK * Cin * N * HW
    bytes_accessed = 4 * (x_flat.size + w_mat.size + gamma2.size + beta2.size
                          + N * Cout * HW)

    # Single channel block covering all of Cout: the im2col matrix B is built
    # exactly once (it does not depend on the output-channel block).
    out_flat = pl.pallas_call(
        kernel,
        out_shape=jax.ShapeDtypeStruct((N, Cout, HW), jnp.float32),
        grid_spec=pltpu.PrefetchScalarGridSpec(
            num_scalar_prefetch=0,
            grid=(1,),
            in_specs=[
                pl.BlockSpec((N * Cin, HW), lambda j: (0, 0)),
                pl.BlockSpec((Cout, KKC_pad), lambda j: (0, 0)),
                pl.BlockSpec((Cout, 1), lambda j: (0, 0)),
                pl.BlockSpec((Cout, 1), lambda j: (0, 0)),
            ],
            out_specs=pl.BlockSpec((N, Cout, HW), lambda j: (0, 0, 0)),
            scratch_shapes=[
                pltpu.VMEM((N * Cin, HW + 2 * _PAD), jnp.float32),
                pltpu.VMEM((KKC_pad, N * HW), jnp.float32),
            ],
        ),
        compiler_params=pltpu.CompilerParams(
            dimension_semantics=("arbitrary",)),
        cost_estimate=pl.CostEstimate(
            flops=flops, transcendentals=0, bytes_accessed=bytes_accessed),
    )(x_flat, w_mat, gamma2, beta2)

    return out_flat.reshape(N, Cout, H, W)


def _reference(x_nchw, w_oihw, bias, gamma, beta):
    """Pure-JAX reference with the same semantics (conv bias included)."""
    y = lax.conv_general_dilated(
        x_nchw.astype(jnp.float32), w_oihw.astype(jnp.float32),
        window_strides=(1, 1), padding=((1, 1), (1, 1)),
        dimension_numbers=("NCHW", "OIHW", "NCHW"))
    y = y + bias.reshape(1, -1, 1, 1)
    mean = jnp.mean(y, axis=(0, 2, 3), keepdims=True)
    var = jnp.mean((y - mean) ** 2, axis=(0, 2, 3), keepdims=True)
    y = (y - mean) * lax.rsqrt(var + BN_EPS)
    y = y * gamma.reshape(1, -1, 1, 1) + beta.reshape(1, -1, 1, 1)
    return jnp.maximum(y, 0.0)


if __name__ == "__main__":
    key = jax.random.PRNGKey(0)
    k_x, k_w, k_b, k_g, k_be = jax.random.split(key, 5)

    # ConvBnRelu(in_channels=4, out_channels=8, kernel_size=3)
    N, Cin, Cout, H, W, K = 2, 4, 8, 16, 16, 3

    x = jax.random.normal(k_x, (N, Cin, H, W), dtype=jnp.float32)
    w = jax.random.normal(k_w, (Cout, Cin, K, K), dtype=jnp.float32) * 0.1   # conv weight (OIHW)
    b = jax.random.normal(k_b, (Cout,), dtype=jnp.float32) * 0.1             # conv bias
    gamma = 1.0 + 0.1 * jax.random.normal(k_g, (Cout,), dtype=jnp.float32)   # BN weight
    beta = 0.1 * jax.random.normal(k_be, (Cout,), dtype=jnp.float32)         # BN bias

    out = conv_bn_relu(x, w, b, gamma, beta)
    jax.block_until_ready(out)

    ref = _reference(x, w, b, gamma, beta)
    assert out.shape == (N, Cout, H, W)
    err = float(jnp.max(jnp.abs(out - ref)))
    assert err < 2e-3, f"mismatch vs. reference: {err}"

    print("KERNEL_OK")
</pallas_src>

<mosaic_0001>
module attributes {stable_mosaic.version = 11 : i64} {
  func.func @_conv_bn_relu_kernel(%arg0: i32, %arg1: memref<8x256xf32, #tpu.memory_space<vmem>>, %arg2: memref<8x40xf32, #tpu.memory_space<vmem>>, %arg3: memref<8x1xf32, #tpu.memory_space<vmem>>, %arg4: memref<8x1xf32, #tpu.memory_space<vmem>>, %arg5: memref<2x8x256xf32, #tpu.memory_space<vmem>>, %arg6: memref<8x512xf32, #tpu.memory_space<vmem>>, %arg7: memref<40x512xf32, #tpu.memory_space<vmem>>) attributes {dimension_semantics = [#tpu.dimension_semantics<arbitrary>], iteration_bounds = array<i64: 1>, scalar_prefetch = 0 : i64, scratch_operands = 2 : i64, tpu.core_type = #tpu.core_type<tc>, window_params = [{pipeline_mode = #tpu.pipeline_mode<synchronous>, transform_indices = @transform_0, window_bounds = array<i64: 8, 256>}, {pipeline_mode = #tpu.pipeline_mode<synchronous>, transform_indices = @transform_1, window_bounds = array<i64: 8, 40>}, {pipeline_mode = #tpu.pipeline_mode<synchronous>, transform_indices = @transform_2, window_bounds = array<i64: 8, 1>}, {pipeline_mode = #tpu.pipeline_mode<synchronous>, transform_indices = @transform_3, window_bounds = array<i64: 8, 1>}, {pipeline_mode = #tpu.pipeline_mode<synchronous>, transform_indices = @transform_4, window_bounds = array<i64: 2, 8, 256>}]} {
    %cst = arith.constant 0.000000e+00 : f32
    %0 = vector.broadcast %cst : f32 to vector<8x128xf32>
    %c0 = arith.constant 0 : index
    %c0_0 = arith.constant 0 : index
    %1 = vector.load %arg6[%c0, %c0_0] : memref<8x512xf32, #tpu.memory_space<vmem>>, vector<8x128xf32>
    tpu.vector_store %arg6[%c0, %c0_0], %0 {strides = array<i32>} : memref<8x512xf32, #tpu.memory_space<vmem>>, vector<8x128xf32>,
    %cst_1 = arith.constant 0.000000e+00 : f32
    %2 = vector.broadcast %cst_1 : f32 to vector<8x128xf32>
    %c0_2 = arith.constant 0 : index
    %c384 = arith.constant 384 : index
    %3 = vector.load %arg6[%c0_2, %c384] : memref<8x512xf32, #tpu.memory_space<vmem>>, vector<8x128xf32>
    tpu.vector_store %arg6[%c0_2, %c384], %2 {strides = array<i32>} : memref<8x512xf32, #tpu.memory_space<vmem>>, vector<8x128xf32>,
    %c0_3 = arith.constant 0 : index
    %c0_4 = arith.constant 0 : index
    %4 = vector.load %arg1[%c0_3, %c0_4] : memref<8x256xf32, #tpu.memory_space<vmem>>, vector<8x256xf32>
    %c0_5 = arith.constant 0 : index
    %c128 = arith.constant 128 : index
    %5 = vector.load %arg6[%c0_5, %c128] : memref<8x512xf32, #tpu.memory_space<vmem>>, vector<8x256xf32>
    tpu.vector_store %arg6[%c0_5, %c128], %4 {strides = array<i32>} : memref<8x512xf32, #tpu.memory_space<vmem>>, vector<8x256xf32>,
    %6 = tpu.iota {dimensions = array<i32: 1>} : vector<8x256xi32>
    %c16_i32 = arith.constant 16 : i32
    %c0_i32 = arith.constant 0 : i32
    %7 = arith.cmpi eq, %c16_i32, %c0_i32 : i32
    %c1_i32 = arith.constant 1 : i32
    %8 = arith.select %7, %c1_i32, %c16_i32 : i32
    %9 = vector.broadcast %8 : i32 to vector<8x256xi32>
    %10 = arith.remsi %6, %9 : vector<8x256xi32>
    %c0_i32_6 = arith.constant 0 : i32
    %11 = vector.broadcast %c0_i32_6 : i32 to vector<8x256xi32>
    %12 = arith.cmpi ne, %10, %11 : vector<8x256xi32>
    %c0_i32_7 = arith.constant 0 : i32
    %13 = vector.broadcast %c0_i32_7 : i32 to vector<8x256xi32>
    %14 = arith.cmpi slt, %10, %13 : vector<8x256xi32>
    %c0_i32_8 = arith.constant 0 : i32
    %15 = arith.cmpi slt, %8, %c0_i32_8 : i32
    %16 = vector.broadcast %15 : i1 to vector<8x256xi1>
    %17 = vector.broadcast %16 : vector<8x256xi1> to vector<8x256xi1>
    %18 = arith.xori %14, %17 : vector<8x256xi1>
    %19 = arith.andi %18, %12 : vector<8x256xi1>
    %20 = vector.broadcast %8 : i32 to vector<8x256xi32>
    %21 = arith.addi %10, %20 : vector<8x256xi32>
    %22 = arith.select %19, %21, %10 : vector<8x256xi1>, vector<8x256xi32>
    %c0_i32_9 = arith.constant 0 : i32
    %23 = vector.broadcast %c0_i32_9 : i32 to vector<8x256xi32>
    %24 = arith.cmpi ne, %22, %23 : vector<8x256xi32>
    %c15_i32 = arith.constant 15 : i32
    %25 = vector.broadcast %c15_i32 : i32 to vector<8x256xi32>
    %26 = arith.cmpi ne, %22, %25 : vector<8x256xi32>
    %cst_10 = arith.constant 0.000000e+00 : f32
    %27 = vector.broadcast %cst_10 : f32 to vector<8x256xf32>
    %c0_11 = arith.constant 0 : index
    %c111 = arith.constant 111 : index
    %28 = vector.load %arg6[%c0_11, %c111] : memref<8x512xf32, #tpu.memory_space<vmem>>, vector<8x256xf32>
    %cst_12 = arith.constant 0.000000e+00 : f32
    %29 = vector.broadcast %cst_12 : f32 to vector<8x256xf32>
    %30 = arith.select %24, %28, %29 : vector<8x256xi1>, vector<8x256xf32>
    %c0_13 = arith.constant 0 : index
    %c112 = arith.constant 112 : index
    %31 = vector.load %arg6[%c0_13, %c112] : memref<8x512xf32, #tpu.memory_space<vmem>>, vector<8x256xf32>
    %32 = vector.extract_strided_slice %30 {offsets = [0, 0], sizes = [4, 256], strides = [1, 1]} : vector<8x256xf32> to vector<4x256xf32>
    %33 = vector.extract_strided_slice %31 {offsets = [0, 0], sizes = [4, 256], strides = [1, 1]} : vector<8x256xf32> to vector<4x256xf32>
    %34 = tpu.concatenate %32, %33 in 0 : vector<4x256xf32>, vector<4x256xf32> -> vector<8x256xf32>
    %c0_14 = arith.constant 0 : index
    %c0_15 = arith.constant 0 : index
    %35 = vector.load %arg7[%c0_14, %c0_15] : memref<40x512xf32, #tpu.memory_space<vmem>>, vector<8x256xf32>
    tpu.vector_store %arg7[%c0_14, %c0_15], %34 {strides = array<i32>} : memref<40x512xf32, #tpu.memory_space<vmem>>, vector<8x256xf32>,
    %36 = vector.extract_strided_slice %30 {offsets = [4, 0], sizes = [4, 256], strides = [1, 1]} : vector<8x256xf32> to vector<4x256xf32>
    %37 = vector.extract_strided_slice %31 {offsets = [4, 0], sizes = [4, 256], strides = [1, 1]} : vector<8x256xf32> to vector<4x256xf32>
    %38 = tpu.concatenate %36, %37 in 0 : vector<4x256xf32>, vector<4x256xf32> -> vector<8x256xf32>
    %c0_16 = arith.constant 0 : index
    %c256 = arith.constant 256 : index
    %39 = vector.load %arg7[%c0_16, %c256] : memref<40x512xf32, #tpu.memory_space<vmem>>, vector<8x256xf32>
    tpu.vector_store %arg7[%c0_16, %c256], %38 {strides = array<i32>} : memref<40x512xf32, #tpu.memory_space<vmem>>, vector<8x256xf32>,
    %c0_17 = arith.constant 0 : index
    %c113 = arith.constant 113 : index
    %40 = vector.load %arg6[%c0_17, %c113] : memref<8x512xf32, #tpu.memory_space<vmem>>, vector<8x256xf32>
    %cst_18 = arith.constant 0.000000e+00 : f32
    %41 = vector.broadcast %cst_18 : f32 to vector<8x256xf32>
    %42 = arith.select %26, %40, %41 : vector<8x256xi1>, vector<8x256xf32>
    %c0_19 = arith.constant 0 : index
    %c127 = arith.constant 127 : index
    %43 = vector.load %arg6[%c0_19, %c127] : memref<8x512xf32, #tpu.memory_space<vmem>>, vector<8x256xf32>
    %cst_20 = arith.constant 0.000000e+00 : f32
    %44 = vector.broadcast %cst_20 : f32 to vector<8x256xf32>
    %45 = arith.select %24, %43, %44 : vector<8x256xi1>, vector<8x256xf32>
    %46 = vector.extract_strided_slice %42 {offsets = [0, 0], sizes = [4, 256], strides = [1, 1]} : vector<8x256xf32> to vector<4x256xf32>
    %47 = vector.extract_strided_slice %45 {offsets = [0, 0], sizes = [4, 256], strides = [1, 1]} : vector<8x256xf32> to vector<4x256xf32>
    %48 = tpu.concatenate %46, %47 in 0 : vector<4x256xf32>, vector<4x256xf32> -> vector<8x256xf32>
    %c8 = arith.constant 8 : index
    %c0_21 = arith.constant 0 : index
    %49 = vector.load %arg7[%c8, %c0_21] : memref<40x512xf32, #tpu.memory_space<vmem>>, vector<8x256xf32>
    tpu.vector_store %arg7[%c8, %c0_21], %48 {strides = array<i32>} : memref<40x512xf32, #tpu.memory_space<vmem>>, vector<8x256xf32>,
    %50 = vector.extract_strided_slice %42 {offsets = [4, 0], sizes = [4, 256], strides = [1, 1]} : vector<8x256xf32> to vector<4x256xf32>
    %51 = vector.extract_strided_slice %45 {offsets = [4, 0], sizes = [4, 256], strides = [1, 1]} : vector<8x256xf32> to vector<4x256xf32>
    %52 = tpu.concatenate %50, %51 in 0 : vector<4x256xf32>, vector<4x256xf32> -> vector<8x256xf32>
    %c8_22 = arith.constant 8 : index
    %c256_23 = arith.constant 256 : index
    %53 = vector.load %arg7[%c8_22, %c256_23] : memref<40x512xf32, #tpu.memory_space<vmem>>, vector<8x256xf32>
    tpu.vector_store %arg7[%c8_22, %c256_23], %52 {strides = array<i32>} : memref<40x512xf32, #tpu.memory_space<vmem>>, vector<8x256xf32>,
    %c0_24 = arith.constant 0 : index
    %c128_25 = arith.constant 128 : index
    %54 = vector.load %arg6[%c0_24, %c128_25] : memref<8x512xf32, #tpu.memory_space<vmem>>, vector<8x256xf32>
    %c0_26 = arith.constant 0 : index
    %c129 = arith.constant 129 : index
    %55 = vector.load %arg6[%c0_26, %c129] : memref<8x512xf32, #tpu.memory_space<vmem>>, vector<8x256xf32>
    %cst_27 = arith.constant 0.000000e+00 : f32
    %56 = vector.broadcast %cst_27 : f32 to vector<8x256xf32>
    %57 = arith.select %26, %55, %56 : vector<8x256xi1>, vector<8x256xf32>
    %58 = vector.extract_strided_slice %54 {offsets = [0, 0], sizes = [4, 256], strides = [1, 1]} : vector<8x256xf32> to vector<4x256xf32>
    %59 = vector.extract_strided_slice %57 {offsets = [0, 0], sizes = [4, 256], strides = [1, 1]} : vector<8x256xf32> to vector<4x256xf32>
    %60 = tpu.concatenate %58, %59 in 0 : vector<4x256xf32>, vector<4x256xf32> -> vector<8x256xf32>
    %c16 = arith.constant 16 : index
    %c0_28 = arith.constant 0 : index
    %61 = vector.load %arg7[%c16, %c0_28] : memref<40x512xf32, #tpu.memory_space<vmem>>, vector<8x256xf32>
    tpu.vector_store %arg7[%c16, %c0_28], %60 {strides = array<i32>} : memref<40x512xf32, #tpu.memory_space<vmem>>, vector<8x256xf32>,
    %62 = vector.extract_strided_slice %54 {offsets = [4, 0], sizes = [4, 256], strides = [1, 1]} : vector<8x256xf32> to vector<4x256xf32>
    %63 = vector.extract_strided_slice %57 {offsets = [4, 0], sizes = [4, 256], strides = [1, 1]} : vector<8x256xf32> to vector<4x256xf32>
    %64 = tpu.concatenate %62, %63 in 0 : vector<4x256xf32>, vector<4x256xf32> -> vector<8x256xf32>
    %c16_29 = arith.constant 16 : index
    %c256_30 = arith.constant 256 : index
    %65 = vector.load %arg7[%c16_29, %c256_30] : memref<40x512xf32, #tpu.memory_space<vmem>>, vector<8x256xf32>
    tpu.vector_store %arg7[%c16_29, %c256_30], %64 {strides = array<i32>} : memref<40x512xf32, #tpu.memory_space<vmem>>, vector<8x256xf32>,
    %c0_31 = arith.constant 0 : index
    %c143 = arith.constant 143 : index
    %66 = vector.load %arg6[%c0_31, %c143] : memref<8x512xf32, #tpu.memory_space<vmem>>, vector<8x256xf32>
    %cst_32 = arith.constant 0.000000e+00 : f32
    %67 = vector.broadcast %cst_32 : f32 to vector<8x256xf32>
    %68 = arith.select %24, %66, %67 : vector<8x256xi1>, vector<8x256xf32>
    %c0_33 = arith.constant 0 : index
    %c144 = arith.constant 144 : index
    %69 = vector.load %arg6[%c0_33, %c144] : memref<8x512xf32, #tpu.memory_space<vmem>>, vector<8x256xf32>
    %70 = vector.extract_strided_slice %68 {offsets = [0, 0], sizes = [4, 256], strides = [1, 1]} : vector<8x256xf32> to vector<4x256xf32>
    %71 = vector.extract_strided_slice %69 {offsets = [0, 0], sizes = [4, 256], strides = [1, 1]} : vector<8x256xf32> to vector<4x256xf32>
    %72 = tpu.concatenate %70, %71 in 0 : vector<4x256xf32>, vector<4x256xf32> -> vector<8x256xf32>
    %c24 = arith.constant 24 : index
    %c0_34 = arith.constant 0 : index
    %73 = vector.load %arg7[%c24, %c0_34] : memref<40x512xf32, #tpu.memory_space<vmem>>, vector<8x256xf32>
    tpu.vector_store %arg7[%c24, %c0_34], %72 {strides = array<i32>} : memref<40x512xf32, #tpu.memory_space<vmem>>, vector<8x256xf32>,
    %74 = vector.extract_strided_slice %68 {offsets = [4, 0], sizes = [4, 256], strides = [1, 1]} : vector<8x256xf32> to vector<4x256xf32>
    %75 = vector.extract_strided_slice %69 {offsets = [4, 0], sizes = [4, 256], strides = [1, 1]} : vector<8x256xf32> to vector<4x256xf32>
    %76 = tpu.concatenate %74, %75 in 0 : vector<4x256xf32>, vector<4x256xf32> -> vector<8x256xf32>
    %c24_35 = arith.constant 24 : index
    %c256_36 = arith.constant 256 : index
    %77 = vector.load %arg7[%c24_35, %c256_36] : memref<40x512xf32, #tpu.memory_space<vmem>>, vector<8x256xf32>
    tpu.vector_store %arg7[%c24_35, %c256_36], %76 {strides = array<i32>} : memref<40x512xf32, #tpu.memory_space<vmem>>, vector<8x256xf32>,
    %c0_37 = arith.constant 0 : index
    %c145 = arith.constant 145 : index
    %78 = vector.load %arg6[%c0_37, %c145] : memref<8x512xf32, #tpu.memory_space<vmem>>, vector<8x256xf32>
    %cst_38 = arith.constant 0.000000e+00 : f32
    %79 = vector.broadcast %cst_38 : f32 to vector<8x256xf32>
    %80 = arith.select %26, %78, %79 : vector<8x256xi1>, vector<8x256xf32>
    %81 = vector.extract_strided_slice %80 {offsets = [0, 0], sizes = [4, 256], strides = [1, 1]} : vector<8x256xf32> to vector<4x256xf32>
    %82 = vector.extract_strided_slice %27 {offsets = [0, 0], sizes = [4, 256], strides = [1, 1]} : vector<8x256xf32> to vector<4x256xf32>
    %83 = tpu.concatenate %81, %82 in 0 : vector<4x256xf32>, vector<4x256xf32> -> vector<8x256xf32>
    %c32 = arith.constant 32 : index
    %c0_39 = arith.constant 0 : index
    %84 = vector.load %arg7[%c32, %c0_39] : memref<40x512xf32, #tpu.memory_space<vmem>>, vector<8x256xf32>
    tpu.vector_store %arg7[%c32, %c0_39], %83 {strides = array<i32>} : memref<40x512xf32, #tpu.memory_space<vmem>>, vector<8x256xf32>,
    %85 = vector.extract_strided_slice %80 {offsets = [4, 0], sizes = [4, 256], strides = [1, 1]} : vector<8x256xf32> to vector<4x256xf32>
    %86 = vector.extract_strided_slice %27 {offsets = [4, 0], sizes = [4, 256], strides = [1, 1]} : vector<8x256xf32> to vector<4x256xf32>
    %87 = tpu.concatenate %85, %86 in 0 : vector<4x256xf32>, vector<4x256xf32> -> vector<8x256xf32>
    %c32_40 = arith.constant 32 : index
    %c256_41 = arith.constant 256 : index
    %88 = vector.load %arg7[%c32_40, %c256_41] : memref<40x512xf32, #tpu.memory_space<vmem>>, vector<8x256xf32>
    tpu.vector_store %arg7[%c32_40, %c256_41], %87 {strides = array<i32>} : memref<40x512xf32, #tpu.memory_space<vmem>>, vector<8x256xf32>,
    %c0_42 = arith.constant 0 : index
    %c0_43 = arith.constant 0 : index
    %89 = vector.load %arg2[%c0_42, %c0_43] : memref<8x40xf32, #tpu.memory_space<vmem>>, vector<8x40xf32>
    %c0_44 = arith.constant 0 : index
    %c0_45 = arith.constant 0 : index
    %90 = vector.load %arg7[%c0_44, %c0_45] : memref<40x512xf32, #tpu.memory_space<vmem>>, vector<40x512xf32>
    %cst_46 = arith.constant dense<0.000000e+00> : vector<8x512xf32>
    %91 = tpu.matmul %89, %90, %cst_46 {dimension_numbers = #tpu.dot_dimension_numbers<[1], [0], [0], [1], [0, 0, 1, 1], [], []>} : vector<8x40xf32>, vector<40x512xf32>, vector<8x512xf32> -> vector<8x512xf32>
    %cst_47 = arith.constant dense<0.000000e+00> : vector<8xf32>
    %92 = vector.multi_reduction <add>, %91, %cst_47 [1] : vector<8x512xf32> to vector<8xf32>
    %93 = vector.shape_cast %92 : vector<8xf32> to vector<8x1xf32>
    %cst_48 = arith.constant 0.001953125 : f32
    %94 = vector.broadcast %cst_48 : f32 to vector<8x1xf32>
    %95 = arith.mulf %93, %94 : vector<8x1xf32>
    %96 = vector.broadcast %95 : vector<8x1xf32> to vector<8x512xf32>
    %97 = arith.subf %91, %96 : vector<8x512xf32>
    %98 = arith.mulf %97, %97 : vector<8x512xf32>
    %cst_49 = arith.constant dense<0.000000e+00> : vector<8xf32>
    %99 = vector.multi_reduction <add>, %98, %cst_49 [1] : vector<8x512xf32> to vector<8xf32>
    %100 = vector.shape_cast %99 : vector<8xf32> to vector<8x1xf32>
    %cst_50 = arith.constant 0.001953125 : f32
    %101 = vector.broadcast %cst_50 : f32 to vector<8x1xf32>
    %102 = arith.mulf %100, %101 : vector<8x1xf32>
    %c0_51 = arith.constant 0 : index
    %c0_52 = arith.constant 0 : index
    %103 = vector.load %arg3[%c0_51, %c0_52] : memref<8x1xf32, #tpu.memory_space<vmem>>, vector<8x1xf32>
    %cst_53 = arith.constant 9.99999974E-6 : f32
    %104 = vector.broadcast %cst_53 : f32 to vector<8x1xf32>
    %105 = arith.addf %102, %104 : vector<8x1xf32>
    %106 = math.rsqrt %105 : vector<8x1xf32>
    %107 = arith.mulf %103, %106 : vector<8x1xf32>
    %108 = vector.broadcast %107 : vector<8x1xf32> to vector<8x512xf32>
    %109 = arith.mulf %97, %108 : vector<8x512xf32>
    %c0_54 = arith.constant 0 : index
    %c0_55 = arith.constant 0 : index
    %110 = vector.load %arg4[%c0_54, %c0_55] : memref<8x1xf32, #tpu.memory_space<vmem>>, vector<8x1xf32>
    %111 = vector.broadcast %110 : vector<8x1xf32> to vector<8x512xf32>
    %112 = arith.addf %109, %111 : vector<8x512xf32>
    %cst_56 = arith.constant 0.000000e+00 : f32
    %113 = vector.broadcast %cst_56 : f32 to vector<8x512xf32>
    %114 = arith.maximumf %112, %113 : vector<8x512xf32>
    %115 = vector.extract_strided_slice %114 {offsets = [0, 0], sizes = [8, 256], strides = [1, 1]} : vector<8x512xf32> to vector<8x256xf32>
    %c0_57 = arith.constant 0 : index
    %c0_58 = arith.constant 0 : index
    %c0_59 = arith.constant 0 : index
    %116 = vector.load %arg5[%c0_57, %c0_58, %c0_59] : memref<2x8x256xf32, #tpu.memory_space<vmem>>, vector<1x8x256xf32>
    %117 = vector.shape_cast %116 : vector<1x8x256xf32> to vector<8x256xf32>
    %118 = vector.shape_cast %115 : vector<8x256xf32> to vector<1x8x256xf32>
    tpu.vector_store %arg5[%c0_57, %c0_58, %c0_59], %118 {strides = array<i32>} : memref<2x8x256xf32, #tpu.memory_space<vmem>>, vector<1x8x256xf32>,
    %119 = vector.extract_strided_slice %114 {offsets = [0, 256], sizes = [8, 256], strides = [1, 1]} : vector<8x512xf32> to vector<8x256xf32>
    %c1 = arith.constant 1 : index
    %c0_60 = arith.constant 0 : index
    %c0_61 = arith.constant 0 : index
    %120 = vector.load %arg5[%c1, %c0_60, %c0_61] : memref<2x8x256xf32, #tpu.memory_space<vmem>>, vector<1x8x256xf32>
    %121 = vector.shape_cast %120 : vector<1x8x256xf32> to vector<8x256xf32>
    %122 = vector.shape_cast %119 : vector<8x256xf32> to vector<1x8x256xf32>
    tpu.vector_store %arg5[%c1, %c0_60, %c0_61], %122 {strides = array<i32>} : memref<2x8x256xf32, #tpu.memory_space<vmem>>, vector<1x8x256xf32>,
    return
  }
  func.func @transform_0(%arg0: i32) -> (i32, i32) {
    %c0_i32 = arith.constant 0 : i32
    %c0_i32_0 = arith.constant 0 : i32
    %c0_i32_1 = arith.constant 0 : i32
    return %c0_i32, %c0_i32_0 : i32, i32
  }
  func.func @transform_1(%arg0: i32) -> (i32, i32) {
    %c0_i32 = arith.constant 0 : i32
    %c0_i32_0 = arith.constant 0 : i32
    %c0_i32_1 = arith.constant 0 : i32
    return %c0_i32, %c0_i32_0 : i32, i32
  }
  func.func @transform_2(%arg0: i32) -> (i32, i32) {
    %c0_i32 = arith.constant 0 : i32
    %c0_i32_0 = arith.constant 0 : i32
    %c0_i32_1 = arith.constant 0 : i32
    return %c0_i32, %c0_i32_0 : i32, i32
  }
  func.func @transform_3(%arg0: i32) -> (i32, i32) {
    %c0_i32 = arith.constant 0 : i32
    %c0_i32_0 = arith.constant 0 : i32
    %c0_i32_1 = arith.constant 0 : i32
    return %c0_i32, %c0_i32_0 : i32, i32
  }
  func.func @transform_4(%arg0: i32) -> (i32, i32, i32) {
    %c0_i32 = arith.constant 0 : i32
    %c0_i32_0 = arith.constant 0 : i32
    %c0_i32_1 = arith.constant 0 : i32
    %c0_i32_2 = arith.constant 0 : i32
    return %c0_i32, %c0_i32_0, %c0_i32_1 : i32, i32, i32
  }
}

</mosaic_0001>

<llo_original>
// kernel: tpu_custom_call.1
$region0: #{tpu_custom_call.1}
  #allocation0 [shape = 'u32[]', space=smem, size = 0x4, offset = 0x4, fixed_abs, tag = 'smem constant byte address 0x4 - core index']
  #allocation1 [shape = 'u32[144,128]{1,0:T(1,128)}', space=vmem, size = 0x12000, scoped, tag = 'internal scratch']
  #allocation2 [shape = 'f32[8,512]{1,0:T(8,128)}', space=vmem, size = 0x4000, scoped, tag = 'scratch operand']
  #allocation3 [shape = 'f32[40,512]{1,0:T(8,128)}', space=vmem, size = 0x14000, scoped, tag = 'scratch operand']
  %s0 = inlined_call_operand.vmem [shape: f32[8,256], index: 0, kind: input, shape index: {}]
  %s1 = inlined_call_operand.hbm [shape: f32[8,40], index: 1, kind: input, shape index: {}]
  %s2 = inlined_call_operand.vmem [shape: f32[8,1], index: 2, kind: input, shape index: {}]
  %s3 = inlined_call_operand.vmem [shape: f32[8,1], index: 3, kind: input, shape index: {}]
  %s4 = inlined_call_operand.hbm [shape: f32[2,8,256], index: 4, kind: output, shape index: {}]
  %s5 = sld [smem:[#allocation0]]
  $region30: #{tpu_custom_call.1} parent=0
    _
  %s7 = ssub.s32 1, %s5
  %s8 = scalar_select 0, %s7, %s5
  $region1: #{tpu_custom_call.1} parent=0
    #allocation4 [shape = 'u8[4096]{0}', space=vmem, size = 0x1000, scoped, tag = 'input window, operand 1, single buffered']
    #allocation5 [shape = 's32[1]{0}', space=sflag, size = 0x4, scoped, tag = 'scoped memory for tpu_custom_call.1']
    #allocation6 [shape = 's32[1]{0}', space=sflag, size = 0x4, scoped, tag = 'scoped memory for tpu_custom_call.1']
    #allocation7 [shape = 'u8[16384]{0}', space=vmem, size = 0x4000, scoped, tag = 'output window, operand 0, single buffered']
    %9 = vsyncpa [#allocation5], 0
    %10 = vsyncpa [#allocation6], 0
    // Predicated region
    $region2: #{tpu_custom_call.1} parent=1 // pred_check
      _
    $region3: #{tpu_custom_call.1} parent=1 // pred_check_branch
      %12 = sbr.rel (0) target = $region5
    $region4: #{tpu_custom_call.1} parent=1 // pred_region
      _
    $region5: #{tpu_custom_call.1} parent=1 // pred_fallthru
      _
    // Predicated region
    $region6: #{tpu_custom_call.1} parent=1 // pred_check
      _
    $region7: #{tpu_custom_call.1} parent=1 // pred_check_branch
      %14 = sbr.rel (0) target = $region9
    $region8: #{tpu_custom_call.1} parent=1 // pred_region
      %s16 = ssub.s32 128, 128
      %17 = vsyncadd [#allocation5], %s16
      %s19 = sshll.u32 [#allocation4], 4
      %s20 = int_to_ptr.vmem [resolvable:$true] %s19
      %22 = dma.hbm_to_vmem [thread:$0]  %s1, 128, %s20, [#allocation5]
    $region9: #{tpu_custom_call.1} parent=1 // pred_fallthru
      _
    // Predicated region
    $region10: #{tpu_custom_call.1} parent=1 // pred_check
      _
    $region11: #{tpu_custom_call.1} parent=1 // pred_check_branch
      %24 = sbr.rel (0) target = $region13
    $region12: #{tpu_custom_call.1} parent=1 // pred_region
      _
    $region13: #{tpu_custom_call.1} parent=1 // pred_fallthru
      _
    // Predicated region
    $region14: #{tpu_custom_call.1} parent=1 // pred_check
      _
    $region15: #{tpu_custom_call.1} parent=1 // pred_check_branch
      %26 = sbr.rel (0) target = $region17
    $region16: #{tpu_custom_call.1} parent=1 // pred_region
      _
    $region17: #{tpu_custom_call.1} parent=1 // pred_fallthru
      _
    // Predicated region
    $region18: #{tpu_custom_call.1} parent=1 // pred_check
      _
    $region19: #{tpu_custom_call.1} parent=1 // pred_check_branch
      %28 = sbr.rel (0) target = $region21
    $region20: #{tpu_custom_call.1} parent=1 // pred_region
      %29 = dma.done [#allocation5], 128
    $region21: #{tpu_custom_call.1} parent=1 // pred_fallthru
      _
    %30 = vst [vmem:[#allocation2] sm:$0xff] 0.0
    %31 = vst [vmem:[#allocation2 + $0x18] sm:$0xff] 0.0
    %v32 = vld [vmem:[%s0] sm:$0xff]
    %v33 = vld [vmem:[%s0 + $0x8] sm:$0xff]
    %34 = vst [vmem:[#allocation2 + $0x8] sm:$0xff] %v32
    %35 = vst [vmem:[#allocation2 + $0x10] sm:$0xff] %v33
    %v36 = vlaneseq
    %v37 = vand.u32 %v36, 127
    %v38 = vadd.s32 %v37, 128
    %vm39 = vcmp.lt.s32.totalorder %v37, 0
    %v40 = vsub.s32 0, %v37
    %v41 = vsel %vm39, %v40, %v37
    %v42 = vshrl.u32 %v41, 4
    %v43 = vand.u32 %v41, 15
    %v44 = vsub.s32 0, %v43
    %v45 = vsel %vm39, %v44, %v43
    %vm46 = vcmp.lt.s32.totalorder %v38, 0
    %v47 = vsub.s32 0, %v38
    %v48 = vsel %vm46, %v47, %v38
    %v49 = vshrl.u32 %v48, 4
    %v50 = vand.u32 %v48, 15
    %v51 = vsub.s32 0, %v50
    %v52 = vsel %vm46, %v51, %v50
    %vm53 = vcmp.ne.s32.totalorder %v45, 0
    %vm54 = vcmp.ne.s32.totalorder %v52, 0
    %vm55 = vcmp.lt.s32.totalorder %v45, 0
    %vm56 = vcmp.lt.s32.totalorder %v52, 0
    %vm57 = vmand %vm55, %vm53
    %vm58 = vmand %vm56, %vm54
    %v59 = vadd.s32 %v45, 16
    %v60 = vadd.s32 %v52, 16
    %v61 = vsel %vm57, %v59, %v45
    %v62 = vsel %vm58, %v60, %v52
    %vm63 = vcmp.ne.s32.totalorder %v61, 0
    %vm64 = vcmp.ne.s32.totalorder %v62, 0
    %vm65 = vcmp.ne.s32.totalorder %v61, 15
    %vm66 = vcmp.ne.s32.totalorder %v62, 15
    %v67 = vld [vmem:[#allocation2] sm:$0xff]
    %v68 = vld [vmem:[#allocation2 + $0x8] sm:$0xff]
    %v69 = vld [vmem:[#allocation2 + $0x10] sm:$0xff]
    %73 = vrot.lane.b32.xlu0 %v67, 17
    %v74 = vpop.permute.xlu0 %73
    %75 = vrot.lane.b32.xlu0 %v68, 17
    %v76 = vpop.permute.xlu0 %75
    %77 = vrot.lane.b32.xlu0 %v69, 17
    %v78 = vpop.permute.xlu0 %77
    %vm79 = vcmask 138240
    %v80 = vsel %vm79, %v74, %v76
    %v81 = vsel %vm79, %v76, %v78
    %v84 = vsel %vm63, %v80, 0.0
    %v85 = vsel %vm64, %v81, 0.0
    %v86 = vrot.slane %v67, 4
    %v87 = vrot.slane %v68, 4
    %v88 = vrot.slane %v69, 4
    %89 = vrot.lane.b32.xlu0 %v86, 16
    %v90 = vpop.permute.xlu0 %89
    %91 = vrot.lane.b32.xlu0 %v87, 16
    %v92 = vpop.permute.xlu0 %91
    %93 = vrot.lane.b32.xlu0 %v88, 16
    %v94 = vpop.permute.xlu0 %93
    %vm95 = vcmask 130048
    %v96 = vsel %vm95, %v90, %v92
    %v97 = vsel %vm95, %v92, %v94
    %vm100 = vcmask 1043456
    %v101 = vsel %vm100, %v84, %v96
    %v102 = vsel %vm100, %v85, %v97
    %103 = vst [vmem:[#allocation3] sm:$0xff] %v101
    %104 = vst [vmem:[#allocation3 + $0x8] sm:$0xff] %v102
    %v107 = vrot.slane %v84, 4
    %v108 = vrot.slane %v85, 4
    %111 = vrot.lane.b32.xlu0 %v67, 16
    %v112 = vpop.permute.xlu0 %111
    %113 = vrot.lane.b32.xlu0 %v68, 16
    %v114 = vpop.permute.xlu0 %113
    %115 = vrot.lane.b32.xlu0 %v69, 16
    %v116 = vpop.permute.xlu0 %115
    %v117 = vsel %vm95, %v112, %v114
    %v118 = vsel %vm95, %v114, %v116
    %v121 = vsel %vm100, %v107, %v117
    %v122 = vsel %vm100, %v108, %v118
    %123 = vst [vmem:[#allocation3 + $0x10] sm:$0xff] %v121
    %124 = vst [vmem:[#allocation3 + $0x18] sm:$0xff] %v122
    %v125 = vld [vmem:[#allocation2] sm:$0xff]
    %v126 = vld [vmem:[#allocation2 + $0x8] sm:$0xff]
    %v127 = vld [vmem:[#allocation2 + $0x10] sm:$0xff]
    %131 = vrot.lane.b32.xlu0 %v125, 15
    %v132 = vpop.permute.xlu0 %131
    %133 = vrot.lane.b32.xlu0 %v126, 15
    %v134 = vpop.permute.xlu0 %133
    %135 = vrot.lane.b32.xlu0 %v127, 15
    %v136 = vpop.permute.xlu0 %135
    %vm137 = vcmask 121856
    %v138 = vsel %vm137, %v132, %v134
    %v139 = vsel %vm137, %v134, %v136
    %v142 = vsel %vm65, %v138, 0.0
    %v143 = vsel %vm66, %v139, 0.0
    %144 = vrot.lane.b32.xlu0 %v125, 1
    %v145 = vpop.permute.xlu0 %144
    %146 = vrot.lane.b32.xlu0 %v126, 1
    %v147 = vpop.permute.xlu0 %146
    %148 = vrot.lane.b32.xlu0 %v127, 1
    %v149 = vpop.permute.xlu0 %148
    %vm150 = vcmask 7168
    %v151 = vsel %vm150, %v145, %v147
    %v152 = vsel %vm150, %v147, %v149
    %v155 = vsel %vm63, %v151, 0.0
    %v156 = vsel %vm64, %v152, 0.0
    %v159 = vrot.slane %v155, 4
    %v160 = vrot.slane %v156, 4
    %v163 = vsel %vm100, %v142, %v159
    %v164 = vsel %vm100, %v143, %v160
    %165 = vst [vmem:[#allocation3 + $0x20] sm:$0xff] %v163
    %166 = vst [vmem:[#allocation3 + $0x28] sm:$0xff] %v164
    %v169 = vrot.slane %v142, 4
    %v170 = vrot.slane %v143, 4
    %v173 = vsel %vm100, %v169, %v155
    %v174 = vsel %vm100, %v170, %v156
    %175 = vst [vmem:[#allocation3 + $0x30] sm:$0xff] %v173
    %176 = vst [vmem:[#allocation3 + $0x38] sm:$0xff] %v174
    %v177 = vld [vmem:[#allocation2 + $0x8] sm:$0xff]
    %v178 = vld [vmem:[#allocation2 + $0x10] sm:$0xff]
    %v179 = vld [vmem:[#allocation2 + $0x8] sm:$0xff]
    %v180 = vld [vmem:[#allocation2 + $0x10] sm:$0xff]
    %v181 = vld [vmem:[#allocation2 + $0x18] sm:$0xff]
    %185 = vrot.lane.b32.xlu0 %v179, 127
    %v186 = vpop.permute.xlu0 %185
    %187 = vrot.lane.b32.xlu0 %v180, 127
    %v188 = vpop.permute.xlu0 %187
    %189 = vrot.lane.b32.xlu0 %v181, 127
    %v190 = vpop.permute.xlu0 %189
    %vm191 = vcmask 1039360
    %v192 = vsel %vm191, %v186, %v188
    %v193 = vsel %vm191, %v188, %v190
    %v196 = vsel %vm65, %v192, 0.0
    %v197 = vsel %vm66, %v193, 0.0
    %v200 = vrot.slane %v196, 4
    %v201 = vrot.slane %v197, 4
    %v204 = vsel %vm100, %v177, %v200
    %v205 = vsel %vm100, %v178, %v201
    %206 = vst [vmem:[#allocation3 + $0x40] sm:$0xff] %v204
    %207 = vst [vmem:[#allocation3 + $0x48] sm:$0xff] %v205
    %v210 = vrot.slane %v177, 4
    %v211 = vrot.slane %v178, 4
    %v214 = vsel %vm100, %v210, %v196
    %v215 = vsel %vm100, %v211, %v197
    %216 = vst [vmem:[#allocation3 + $0x50] sm:$0xff] %v214
    %217 = vst [vmem:[#allocation3 + $0x58] sm:$0xff] %v215
    %v218 = vld [vmem:[#allocation2 + $0x8] sm:$0xff]
    %v219 = vld [vmem:[#allocation2 + $0x10] sm:$0xff]
    %v220 = vld [vmem:[#allocation2 + $0x18] sm:$0xff]
    %224 = vrot.lane.b32.xlu0 %v218, 113
    %v225 = vpop.permute.xlu0 %224
    %226 = vrot.lane.b32.xlu0 %v219, 113
    %v227 = vpop.permute.xlu0 %226
    %228 = vrot.lane.b32.xlu0 %v220, 113
    %v229 = vpop.permute.xlu0 %228
    %vm230 = vcmask 924672
    %v231 = vsel %vm230, %v225, %v227
    %v232 = vsel %vm230, %v227, %v229
    %v235 = vsel %vm63, %v231, 0.0
    %v236 = vsel %vm64, %v232, 0.0
    %v237 = vrot.slane %v218, 4
    %v238 = vrot.slane %v219, 4
    %v239 = vrot.slane %v220, 4
    %240 = vrot.lane.b32.xlu0 %v237, 112
    %v241 = vpop.permute.xlu0 %240
    %242 = vrot.lane.b32.xlu0 %v238, 112
    %v243 = vpop.permute.xlu0 %242
    %244 = vrot.lane.b32.xlu0 %v239, 112
    %v245 = vpop.permute.xlu0 %244
    %vm246 = vcmask 916480
    %v247 = vsel %vm246, %v241, %v243
    %v248 = vsel %vm246, %v243, %v245
    %v251 = vsel %vm100, %v235, %v247
    %v252 = vsel %vm100, %v236, %v248
    %253 = vst [vmem:[#allocation3 + $0x60] sm:$0xff] %v251
    %254 = vst [vmem:[#allocation3 + $0x68] sm:$0xff] %v252
    %v257 = vrot.slane %v235, 4
    %v258 = vrot.slane %v236, 4
    %261 = vrot.lane.b32.xlu0 %v218, 112
    %v262 = vpop.permute.xlu0 %261
    %263 = vrot.lane.b32.xlu0 %v219, 112
    %v264 = vpop.permute.xlu0 %263
    %265 = vrot.lane.b32.xlu0 %v220, 112
    %v266 = vpop.permute.xlu0 %265
    %v267 = vsel %vm246, %v262, %v264
    %v268 = vsel %vm246, %v264, %v266
    %v271 = vsel %vm100, %v257, %v267
    %v272 = vsel %vm100, %v258, %v268
    %273 = vst [vmem:[#allocation3 + $0x70] sm:$0xff] %v271
    %274 = vst [vmem:[#allocation3 + $0x78] sm:$0xff] %v272
    %v275 = vld [vmem:[#allocation2 + $0x8] sm:$0xff]
    %v276 = vld [vmem:[#allocation2 + $0x10] sm:$0xff]
    %v277 = vld [vmem:[#allocation2 + $0x18] sm:$0xff]
    %281 = vrot.lane.b32.xlu0 %v275, 111
    %v282 = vpop.permute.xlu0 %281
    %283 = vrot.lane.b32.xlu0 %v276, 111
    %v284 = vpop.permute.xlu0 %283
    %285 = vrot.lane.b32.xlu0 %v277, 111
    %v286 = vpop.permute.xlu0 %285
    %vm287 = vcmask 908288
    %v288 = vsel %vm287, %v282, %v284
    %v289 = vsel %vm287, %v284, %v286
    %v292 = vsel %vm65, %v288, 0.0
    %v293 = vsel %vm66, %v289, 0.0
    %v294 = vsel %vm100, %v292, 0.0
    %v295 = vsel %vm100, %v293, 0.0
    %296 = vst [vmem:[#allocation3 + $0x80] sm:$0xff] %v294
    %297 = vst [vmem:[#allocation3 + $0x88] sm:$0xff] %v295
    %v300 = vrot.slane %v292, 4
    %v301 = vrot.slane %v293, 4
    %v304 = vsel %vm100, %v300, 0.0
    %v305 = vsel %vm100, %v301, 0.0
    %306 = vst [vmem:[#allocation3 + $0x90] sm:$0xff] %v304
    %307 = vst [vmem:[#allocation3 + $0x98] sm:$0xff] %v305
    %v308 = vld [vmem:[#allocation4] sm:$0xff]
    %v309 = vld [vmem:[#allocation3] sm:$0xff]
    %v310 = vld [vmem:[#allocation3 + $0x8] sm:$0xff]
    %v311 = vld [vmem:[#allocation3 + $0x10] sm:$0xff]
    %v312 = vld [vmem:[#allocation3 + $0x18] sm:$0xff]
    %v313 = vld [vmem:[#allocation3 + $0x20] sm:$0xff]
    %v314 = vld [vmem:[#allocation3 + $0x28] sm:$0xff]
    %v315 = vld [vmem:[#allocation3 + $0x30] sm:$0xff]
    %v316 = vld [vmem:[#allocation3 + $0x38] sm:$0xff]
    %v317 = vld [vmem:[#allocation3 + $0x40] sm:$0xff]
    %v318 = vld [vmem:[#allocation3 + $0x48] sm:$0xff]
    %v319 = vld [vmem:[#allocation3 + $0x50] sm:$0xff]
    %v320 = vld [vmem:[#allocation3 + $0x58] sm:$0xff]
    %v321 = vld [vmem:[#allocation3 + $0x60] sm:$0xff]
    %v322 = vld [vmem:[#allocation3 + $0x68] sm:$0xff]
    %v323 = vld [vmem:[#allocation3 + $0x70] sm:$0xff]
    %v324 = vld [vmem:[#allocation3 + $0x78] sm:$0xff]
    %v325 = vld [vmem:[#allocation3 + $0x80] sm:$0xff]
    %v326 = vld [vmem:[#allocation3 + $0x88] sm:$0xff]
    %v327 = vld [vmem:[#allocation3 + $0x90] sm:$0xff]
    %v328 = vld [vmem:[#allocation3 + $0x98] sm:$0xff]
    %vm329 = vcmask 326656
    %v331 = vsel %vm329, %v308, 0
    %333 = vmatprep.subr.mxu0 %v310
    %334 = vmatpush1.msra.mxu0 %v309
    %335 = vmatprep.subr.mxu0 %v314
    %336 = vmatpush1.msra.mxu0 %v313
    %337 = vmatprep.subr.mxu0 %v318
    %338 = vmatpush1.msra.mxu0 %v317
    %339 = vmatprep.subr.mxu0 %v322
    %340 = vmatpush1.msra.mxu0 %v321
    %341 = vmatprep.subr.mxu0 %v326
    %342 = vmatpush1.msra.mxu0 %v325
    %343 = vmatprep.subr.mxu0 0.0
    %344 = vmatpush1.msra.mxu0 0.0
    %345 = vmatprep.subr.mxu0 0.0
    %346 = vmatpush1.msra.mxu0 0.0
    %347 = vmatprep.subr.mxu0 0.0
    %348 = vmatpush1.msra.mxu0 0.0
    %349 = vmatprep.subr.mxu0 0.0
    %350 = vmatpush1.msra.mxu0 0.0
    %351 = vmatprep.subr.mxu0 0.0
    %352 = vmatpush1.msra.mxu0 0.0
    %353 = vmatprep.subr.mxu0 0.0
    %354 = vmatpush1.msra.mxu0 0.0
    %355 = vmatprep.subr.mxu0 0.0
    %356 = vmatpush1.msra.mxu0 0.0
    %357 = vmatprep.subr.mxu0 0.0
    %358 = vmatpush1.msra.mxu0 0.0
    %359 = vmatprep.subr.mxu0 0.0
    %360 = vmatpush1.msra.mxu0 0.0
    %361 = vmatprep.subr.mxu0 0.0
    %362 = vmatpush1.msra.mxu0 0.0
    %363 = vmatprep.subr.mxu0 0.0
    %364 = vmatpush1.msra.mxu0 0.0
    %365 = vmatprep.subr.mxu0 0.0
    %366 = vmatpush1.msra.mxu0 0.0
    %367 = vmatprep.subr.mxu0 0.0
    %368 = vmatpush1.msra.mxu0 0.0
    %369 = vmatprep.subr.mxu0 0.0
    %370 = vmatpush1.msra.mxu0 0.0
    %371 = vmatprep.subr.mxu0 0.0
    %372 = vmatpush1.msra.mxu0 0.0
    %373 = vmatprep.subr.mxu0 0.0
    %374 = vmatpush1.msra.mxu0 0.0
    %375 = vmatprep.subr.mxu0 0.0
    %376 = vmatpush1.msra.mxu0 0.0
    %377 = vmatprep.subr.mxu0 0.0
    %378 = vmatpush1.msra.mxu0 0.0
    %379 = vmatprep.subr.mxu0 0.0
    %380 = vmatpush1.msra.mxu0 0.0
    %381 = vmatprep.subr.mxu0 0.0
    %382 = vmatpush1.msra.mxu0 0.0
    %383 = vmatprep.subr.mxu0 0.0
    %384 = vmatpush1.msra.mxu0 0.0
    %385 = vmatprep.subr.mxu0 0.0
    %386 = vmatpush1.msra.mxu0 0.0
    %387 = vmatprep.subr.mxu0 0.0
    %388 = vmatpush1.msra.mxu0 0.0
    %389 = vmatprep.subr.mxu0 0.0
    %390 = vmatpush1.msra.mxu0 0.0
    %391 = vmatprep.subr.mxu0 0.0
    %392 = vmatpush1.msra.mxu0 0.0
    %393 = vmatprep.subr.mxu0 0.0
    %394 = vmatpush1.msra.mxu0 0.0
    %395 = vmatprep.subr.mxu0 0.0
    %396 = vmatpush1.msra.mxu0 0.0
    %397 = vmatprep.mubr.f32.mxu0 0.0
    %398 = vmatmul.mubr.f32.gmra.mrb[0].mxu0 %v331
    %v399 = vpop.f32.mrb[0].mxu0
    %v400 = vadd.f32 0.0, %v399
    %v401 = vpop.f32.mrb[0].mxu0
    %v402 = vadd.f32 0.0, %v401
    %403 = vdwg.mxu0
    %404 = vmatprep.subr.mxu0 %v312
    %405 = vmatpush1.msra.mxu0 %v311
    %406 = vmatprep.subr.mxu0 %v316
    %407 = vmatpush1.msra.mxu0 %v315
    %408 = vmatprep.subr.mxu0 %v320
    %409 = vmatpush1.msra.mxu0 %v319
    %410 = vmatprep.subr.mxu0 %v324
    %411 = vmatpush1.msra.mxu0 %v323
    %412 = vmatprep.subr.mxu0 %v328
    %413 = vmatpush1.msra.mxu0 %v327
    %414 = vmatprep.subr.mxu0 0.0
    %415 = vmatpush1.msra.mxu0 0.0
    %416 = vmatprep.subr.mxu0 0.0
    %417 = vmatpush1.msra.mxu0 0.0
    %418 = vmatprep.subr.mxu0 0.0
    %419 = vmatpush1.msra.mxu0 0.0
    %420 = vmatprep.subr.mxu0 0.0
    %421 = vmatpush1.msra.mxu0 0.0
    %422 = vmatprep.subr.mxu0 0.0
    %423 = vmatpush1.msra.mxu0 0.0
    %424 = vmatprep.subr.mxu0 0.0
    %425 = vmatpush1.msra.mxu0 0.0
    %426 = vmatprep.subr.mxu0 0.0
    %427 = vmatpush1.msra.mxu0 0.0
    %428 = vmatprep.subr.mxu0 0.0
    %429 = vmatpush1.msra.mxu0 0.0
    %430 = vmatprep.subr.mxu0 0.0
    %431 = vmatpush1.msra.mxu0 0.0
    %432 = vmatprep.subr.mxu0 0.0
    %433 = vmatpush1.msra.mxu0 0.0
    %434 = vmatprep.subr.mxu0 0.0
    %435 = vmatpush1.msra.mxu0 0.0
    %436 = vmatprep.subr.mxu0 0.0
    %437 = vmatpush1.msra.mxu0 0.0
    %438 = vmatprep.subr.mxu0 0.0
    %439 = vmatpush1.msra.mxu0 0.0
    %440 = vmatprep.subr.mxu0 0.0
    %441 = vmatpush1.msra.mxu0 0.0
    %442 = vmatprep.subr.mxu0 0.0
    %443 = vmatpush1.msra.mxu0 0.0
    %444 = vmatprep.subr.mxu0 0.0
    %445 = vmatpush1.msra.mxu0 0.0
    %446 = vmatprep.subr.mxu0 0.0
    %447 = vmatpush1.msra.mxu0 0.0
    %448 = vmatprep.subr.mxu0 0.0
    %449 = vmatpush1.msra.mxu0 0.0
    %450 = vmatprep.subr.mxu0 0.0
    %451 = vmatpush1.msra.mxu0 0.0
    %452 = vmatprep.subr.mxu0 0.0
    %453 = vmatpush1.msra.mxu0 0.0
    %454 = vmatprep.subr.mxu0 0.0
    %455 = vmatpush1.msra.mxu0 0.0
    %456 = vmatprep.subr.mxu0 0.0
    %457 = vmatpush1.msra.mxu0 0.0
    %458 = vmatprep.subr.mxu0 0.0
    %459 = vmatpush1.msra.mxu0 0.0
    %460 = vmatprep.subr.mxu0 0.0
    %461 = vmatpush1.msra.mxu0 0.0
    %462 = vmatprep.subr.mxu0 0.0
    %463 = vmatpush1.msra.mxu0 0.0
    %464 = vmatprep.subr.mxu0 0.0
    %465 = vmatpush1.msra.mxu0 0.0
    %466 = vmatprep.subr.mxu0 0.0
    %467 = vmatpush1.msra.mxu0 0.0
    %468 = vmatprep.mubr.f32.mxu0 0.0
    %469 = vmatmul.mubr.f32.gmra.mrb[0].mxu0 %v331
    %v470 = vpop.f32.mrb[0].mxu0
    %v471 = vadd.f32 0.0, %v470
    %v472 = vpop.f32.mrb[0].mxu0
    %v473 = vadd.f32 0.0, %v472
    %474 = vdwg.mxu0
    %v475 = vadd.f32 %v400, %v402
    %v476 = vadd.f32 %v475, %v471
    %v477 = vadd.f32 %v476, %v473
    %478 = vadd.xlane.f32.xlu0 %v477
    %v479 = vpop.xlane.xlu0 %478
    %v480 = vmul.f32 %v479, 0.001953125
    %v481 = vsub.f32 %v400, %v480
    %v482 = vsub.f32 %v402, %v480
    %v483 = vsub.f32 %v471, %v480
    %v484 = vsub.f32 %v473, %v480
    %v485 = vmul.f32 %v481, %v481
    %v486 = vmul.f32 %v482, %v482
    %v487 = vmul.f32 %v483, %v483
    %v488 = vmul.f32 %v484, %v484
    %v489 = vadd.f32 %v485, %v486
    %v490 = vadd.f32 %v489, %v487
    %v491 = vadd.f32 %v490, %v488
    %492 = vadd.xlane.f32.xlu0 %v491
    %v493 = vpop.xlane.xlu0 %492
    %v494 = vmul.f32 %v493, 0.001953125
    %v495 = vld [vmem:[%s2] sm:$0xff]
    %v496 = vadd.f32 %v494, 1e-05
    %v497 = vrsqrt.pop %v496
    %v498 = vmul.f32 %v495, %v497
    %500 = vset.pattern.permute.xlu0 0
    %501 = vperm.xlu0 %500, %v498
    %v502 = vpop.permute.xlu0 %501
    %v504 = vmul.f32 %v481, %v502
    %v505 = vmul.f32 %v482, %v502
    %v506 = vmul.f32 %v483, %v502
    %v507 = vmul.f32 %v484, %v502
    %v508 = vld [vmem:[%s3] sm:$0xff]
    %510 = vset.pattern.permute.xlu0 0
    %511 = vperm.xlu0 %510, %v508
    %v512 = vpop.permute.xlu0 %511
    %v514 = vadd.f32 %v504, %v512
    %v515 = vadd.f32 %v505, %v512
    %v516 = vadd.f32 %v506, %v512
    %v517 = vadd.f32 %v507, %v512
    %v518 = vmax.f32 %v514, 0.0
    %v519 = vmax.f32 %v515, 0.0
    %v520 = vmax.f32 %v516, 0.0
    %v521 = vmax.f32 %v517, 0.0
    %522 = vst [vmem:[#allocation7] sm:$0xff] %v518
    %523 = vst [vmem:[#allocation7 + $0x8] sm:$0xff] %v519
    %s524 = scalar_lea.vmem [#allocation7], 16
    %525 = vst [vmem:[%s524] sm:$0xff] %v520
    %526 = vst [vmem:[%s524 + $0x8] sm:$0xff] %v521
    // Predicated region
    $region22: #{tpu_custom_call.1} parent=1 // pred_check
      _
    $region23: #{tpu_custom_call.1} parent=1 // pred_check_branch
      %528 = sbr.rel (0) target = $region25
    $region24: #{tpu_custom_call.1} parent=1 // pred_region
      %s530 = ssub.s32 512, 512
      %531 = vsyncadd [#allocation6], %s530
      %s532 = sshll.u32 [#allocation7], 4
      %s533 = int_to_ptr.vmem [resolvable:$true] %s532
      %538 = dma.vmem_to_hbm [thread:$0]  %s533, 512, %s4, [#allocation6], 256, 256, 16
    $region25: #{tpu_custom_call.1} parent=1 // pred_fallthru
      _
    // Predicated region
    $region26: #{tpu_custom_call.1} parent=1 // pred_check
      _
    $region27: #{tpu_custom_call.1} parent=1 // pred_check_branch
      %540 = sbr.rel (0) target = $region29
    $region28: #{tpu_custom_call.1} parent=1 // pred_region
      %541 = dma.done [#allocation6], 512
    $region29: #{tpu_custom_call.1} parent=1 // pred_fallthru
      _
    %542 = vsyncpa [#allocation5], 1
    %543 = vsyncpa [#allocation6], 1

</llo_original>
